<compile_context>
chip_gen: v7x
topology: tpu7x:2x2x1
jax: 0.10.0
libtpu: 0.0.40
codegen_flags: <defaults>
</compile_context>

<pallas_src>
import functools

import jax
import jax.numpy as jnp
from jax.experimental import pallas as pl
from jax.experimental.pallas import tpu as pltpu


def _ssim_kernel(dr_ref, x_ref, y_ref, a_ref, b_ref, out_ref, *, win, k1, k2):
    n = pl.program_id(0)

    x = x_ref[0].astype(jnp.float32)     # (H, C*W)  lane-dense slab
    y = y_ref[0].astype(jnp.float32)
    a_row = a_ref[...]                   # (ho, H)      banded row-window matrix
    b_col = b_ref[...]                   # (C*W, C*wo)  block-diag col-window

    np_ = win * win
    inv_np = 1.0 / np_
    cov_norm = np_ / (np_ - 1.0)

    def box(m):
        # Uniform-window depthwise conv (VALID) as two MXU matmuls.
        r = jnp.dot(a_row, m, preferred_element_type=jnp.float32)
        return jnp.dot(r, b_col, preferred_element_type=jnp.float32) * inv_np

    ux = box(x)
    uy = box(y)
    uxx = box(x * x)
    uyy = box(y * y)
    uxy = box(x * y)

    dr = dr_ref[n]                       # per-sample data_range (SMEM scalar)
    c1 = (k1 * dr) ** 2
    c2 = (k2 * dr) ** 2

    vx = cov_norm * (uxx - ux * ux)
    vy = cov_norm * (uyy - uy * uy)
    vxy = cov_norm * (uxy - ux * uy)

    a1 = 2.0 * ux * uy + c1
    a2 = 2.0 * vxy + c2
    b1 = ux * ux + uy * uy + c1
    b2 = vx + vy + c2

    d = b1 * b2
    r = pl.reciprocal(d, approx=True)    # EUP slot (otherwise idle)
    r = r * (2.0 - d * r)                # one Newton step -> f32 accuracy
    s = (a1 * a2) * r

    # Per-sample lane-dense partial sums (sublane reduce only); the final
    # scalar reduction + (1 - mean) is done in plain JAX outside the kernel.
    out_ref[0] = jnp.sum(s, axis=0, keepdims=True)


def ssim_loss(x, y, data_range, *, win_size=7, k1=0.01, k2=0.03):
    """Pallas implementation of SSIMLoss.forward. Returns a scalar."""
    n, c, h, w = x.shape
    ho, wo = h - win_size + 1, w - win_size + 1
    cw, cwo = c * w, c * wo
    total = float(n * c * ho * wo)

    # Lane-dense layout: (N, H, C*W). Keep native dtype (no f32 cast in HBM).
    xt = jnp.transpose(x, (0, 2, 1, 3)).reshape(n, h, cw)
    yt = jnp.transpose(y, (0, 2, 1, 3)).reshape(n, h, cw)

    # Banded window matrices (constants, resident in VMEM across the grid).
    ii = jnp.arange(ho)[:, None]
    jj = jnp.arange(h)[None, :]
    a_row = ((jj >= ii) & (jj < ii + win_size)).astype(jnp.float32)   # (ho, H)

    wi = jnp.arange(w)[:, None]
    pj = jnp.arange(wo)[None, :]
    a_col = ((wi >= pj) & (wi < pj + win_size)).astype(jnp.float32)   # (W, wo)
    b_col = jnp.kron(jnp.eye(c, dtype=jnp.float32), a_col)            # (C*W, C*wo)

    kernel = functools.partial(_ssim_kernel, win=win_size, k1=k1, k2=k2)

    partial = pl.pallas_call(
        kernel,
        out_shape=jax.ShapeDtypeStruct((n, 1, cwo), jnp.float32),
        grid_spec=pltpu.PrefetchScalarGridSpec(
            num_scalar_prefetch=1,
            grid=(n,),
            in_specs=[
                pl.BlockSpec((1, h, cw), lambda ni, dr: (ni, 0, 0)),
                pl.BlockSpec((1, h, cw), lambda ni, dr: (ni, 0, 0)),
                pl.BlockSpec((ho, h), lambda ni, dr: (0, 0)),
                pl.BlockSpec((cw, cwo), lambda ni, dr: (0, 0)),
            ],
            out_specs=pl.BlockSpec((1, 1, cwo), lambda ni, dr: (ni, 0, 0)),
        ),
        compiler_params=pltpu.CompilerParams(
            dimension_semantics=("parallel",)),
    )(data_range.astype(jnp.float32), xt, yt, a_row, b_col)

    return 1.0 - jnp.sum(partial) / total


def ssim_loss_ref(x, y, data_range, *, win_size=7, k1=0.01, k2=0.03):
    """Pure-JAX reference (mirrors the PyTorch module)."""
    n, c, h, w = x.shape
    wgt = jnp.ones((c, 1, win_size, win_size), jnp.float32) / (win_size ** 2)
    conv = lambda a: jax.lax.conv_general_dilated(
        a, wgt, window_strides=(1, 1), padding="VALID",
        dimension_numbers=("NCHW", "OIHW", "NCHW"), feature_group_count=c)
    dr = data_range.reshape(n, 1, 1, 1).astype(jnp.float32)
    c1 = (k1 * dr) ** 2
    c2 = (k2 * dr) ** 2
    np_ = win_size ** 2
    cov_norm = np_ / (np_ - 1)
    x = x.astype(jnp.float32)
    y = y.astype(jnp.float32)
    ux, uy = conv(x), conv(y)
    uxx, uyy, uxy = conv(x * x), conv(y * y), conv(x * y)
    vx = cov_norm * (uxx - ux * ux)
    vy = cov_norm * (uyy - uy * uy)
    vxy = cov_norm * (uxy - ux * uy)
    a1, a2 = 2 * ux * uy + c1, 2 * vxy + c2
    b1, b2 = ux ** 2 + uy ** 2 + c1, vx + vy + c2
    s = a1 * a2 / (b1 * b2)
    return 1.0 - s.mean()


if __name__ == "__main__":
    key = jax.random.PRNGKey(0)
    kx, ky = jax.random.split(key)

    N, C, H, W = 2, 4, 16, 16
    x = jax.random.uniform(kx, (N, C, H, W), dtype=jnp.float32)
    y = jax.random.uniform(ky, (N, C, H, W), dtype=jnp.float32)
    # data_range: per-sample dynamic range, shape (N,)
    data_range = jnp.maximum(
        x.reshape(N, -1).max(axis=1), y.reshape(N, -1).max(axis=1))

    out = ssim_loss(x, y, data_range)
    out = jax.block_until_ready(out)

    ref = ssim_loss_ref(x, y, data_range)
    assert jnp.allclose(out, ref, rtol=1e-4, atol=1e-5), (out, ref)

    print("KERNEL_OK")
</pallas_src>

<mosaic_0001>
module attributes {stable_mosaic.version = 11 : i64} {
  func.func @_ssim_kernel(%arg0: i32, %arg1: memref<2xf32, #tpu.memory_space<smem>>, %arg2: memref<1x16x64xf32, #tpu.memory_space<vmem>>, %arg3: memref<1x16x64xf32, #tpu.memory_space<vmem>>, %arg4: memref<10x16xf32, #tpu.memory_space<vmem>>, %arg5: memref<64x40xf32, #tpu.memory_space<vmem>>, %arg6: memref<1x1x40xf32, #tpu.memory_space<vmem>>) attributes {dimension_semantics = [#tpu.dimension_semantics<parallel>], iteration_bounds = array<i64: 2>, scalar_prefetch = 1 : i64, scratch_operands = 0 : i64, tpu.core_type = #tpu.core_type<tc>, window_params = [{transform_indices = @transform_0, window_bounds = array<i64: 1, 16, 64>}, {transform_indices = @transform_1, window_bounds = array<i64: 1, 16, 64>}, {pipeline_mode = #tpu.pipeline_mode<synchronous>, transform_indices = @transform_2, window_bounds = array<i64: 10, 16>}, {pipeline_mode = #tpu.pipeline_mode<synchronous>, transform_indices = @transform_3, window_bounds = array<i64: 64, 40>}, {transform_indices = @transform_4, window_bounds = array<i64: 1, 1, 40>}]} {
    %c0 = arith.constant 0 : index
    %c0_0 = arith.constant 0 : index
    %c0_1 = arith.constant 0 : index
    %0 = vector.load %arg2[%c0, %c0_0, %c0_1] : memref<1x16x64xf32, #tpu.memory_space<vmem>>, vector<1x16x64xf32>
    %1 = vector.shape_cast %0 : vector<1x16x64xf32> to vector<16x64xf32>
    %c0_2 = arith.constant 0 : index
    %c0_3 = arith.constant 0 : index
    %c0_4 = arith.constant 0 : index
    %2 = vector.load %arg3[%c0_2, %c0_3, %c0_4] : memref<1x16x64xf32, #tpu.memory_space<vmem>>, vector<1x16x64xf32>
    %3 = vector.shape_cast %2 : vector<1x16x64xf32> to vector<16x64xf32>
    %c0_5 = arith.constant 0 : index
    %c0_6 = arith.constant 0 : index
    %4 = vector.load %arg4[%c0_5, %c0_6] : memref<10x16xf32, #tpu.memory_space<vmem>>, vector<10x16xf32>
    %c0_7 = arith.constant 0 : index
    %c0_8 = arith.constant 0 : index
    %5 = vector.load %arg5[%c0_7, %c0_8] : memref<64x40xf32, #tpu.memory_space<vmem>>, vector<64x40xf32>
    %cst = arith.constant dense<0.000000e+00> : vector<10x64xf32>
    %6 = tpu.matmul %4, %1, %cst {dimension_numbers = #tpu.dot_dimension_numbers<[1], [0], [0], [1], [0, 0, 1, 1], [], []>} : vector<10x16xf32>, vector<16x64xf32>, vector<10x64xf32> -> vector<10x64xf32>
    %cst_9 = arith.constant dense<0.000000e+00> : vector<10x40xf32>
    %7 = tpu.matmul %6, %5, %cst_9 {dimension_numbers = #tpu.dot_dimension_numbers<[1], [0], [0], [1], [0, 0, 1, 1], [], []>} : vector<10x64xf32>, vector<64x40xf32>, vector<10x40xf32> -> vector<10x40xf32>
    %cst_10 = arith.constant 0.0204081628 : f32
    %8 = vector.broadcast %cst_10 : f32 to vector<10x40xf32>
    %9 = arith.mulf %7, %8 : vector<10x40xf32>
    %cst_11 = arith.constant dense<0.000000e+00> : vector<10x64xf32>
    %10 = tpu.matmul %4, %3, %cst_11 {dimension_numbers = #tpu.dot_dimension_numbers<[1], [0], [0], [1], [0, 0, 1, 1], [], []>} : vector<10x16xf32>, vector<16x64xf32>, vector<10x64xf32> -> vector<10x64xf32>
    %cst_12 = arith.constant dense<0.000000e+00> : vector<10x40xf32>
    %11 = tpu.matmul %10, %5, %cst_12 {dimension_numbers = #tpu.dot_dimension_numbers<[1], [0], [0], [1], [0, 0, 1, 1], [], []>} : vector<10x64xf32>, vector<64x40xf32>, vector<10x40xf32> -> vector<10x40xf32>
    %cst_13 = arith.constant 0.0204081628 : f32
    %12 = vector.broadcast %cst_13 : f32 to vector<10x40xf32>
    %13 = arith.mulf %11, %12 : vector<10x40xf32>
    %14 = arith.mulf %1, %1 : vector<16x64xf32>
    %cst_14 = arith.constant dense<0.000000e+00> : vector<10x64xf32>
    %15 = tpu.matmul %4, %14, %cst_14 {dimension_numbers = #tpu.dot_dimension_numbers<[1], [0], [0], [1], [0, 0, 1, 1], [], []>} : vector<10x16xf32>, vector<16x64xf32>, vector<10x64xf32> -> vector<10x64xf32>
    %cst_15 = arith.constant dense<0.000000e+00> : vector<10x40xf32>
    %16 = tpu.matmul %15, %5, %cst_15 {dimension_numbers = #tpu.dot_dimension_numbers<[1], [0], [0], [1], [0, 0, 1, 1], [], []>} : vector<10x64xf32>, vector<64x40xf32>, vector<10x40xf32> -> vector<10x40xf32>
    %cst_16 = arith.constant 0.0204081628 : f32
    %17 = vector.broadcast %cst_16 : f32 to vector<10x40xf32>
    %18 = arith.mulf %16, %17 : vector<10x40xf32>
    %19 = arith.mulf %3, %3 : vector<16x64xf32>
    %cst_17 = arith.constant dense<0.000000e+00> : vector<10x64xf32>
    %20 = tpu.matmul %4, %19, %cst_17 {dimension_numbers = #tpu.dot_dimension_numbers<[1], [0], [0], [1], [0, 0, 1, 1], [], []>} : vector<10x16xf32>, vector<16x64xf32>, vector<10x64xf32> -> vector<10x64xf32>
    %cst_18 = arith.constant dense<0.000000e+00> : vector<10x40xf32>
    %21 = tpu.matmul %20, %5, %cst_18 {dimension_numbers = #tpu.dot_dimension_numbers<[1], [0], [0], [1], [0, 0, 1, 1], [], []>} : vector<10x64xf32>, vector<64x40xf32>, vector<10x40xf32> -> vector<10x40xf32>
    %cst_19 = arith.constant 0.0204081628 : f32
    %22 = vector.broadcast %cst_19 : f32 to vector<10x40xf32>
    %23 = arith.mulf %21, %22 : vector<10x40xf32>
    %24 = arith.mulf %1, %3 : vector<16x64xf32>
    %cst_20 = arith.constant dense<0.000000e+00> : vector<10x64xf32>
    %25 = tpu.matmul %4, %24, %cst_20 {dimension_numbers = #tpu.dot_dimension_numbers<[1], [0], [0], [1], [0, 0, 1, 1], [], []>} : vector<10x16xf32>, vector<16x64xf32>, vector<10x64xf32> -> vector<10x64xf32>
    %cst_21 = arith.constant dense<0.000000e+00> : vector<10x40xf32>
    %26 = tpu.matmul %25, %5, %cst_21 {dimension_numbers = #tpu.dot_dimension_numbers<[1], [0], [0], [1], [0, 0, 1, 1], [], []>} : vector<10x64xf32>, vector<64x40xf32>, vector<10x40xf32> -> vector<10x40xf32>
    %cst_22 = arith.constant 0.0204081628 : f32
    %27 = vector.broadcast %cst_22 : f32 to vector<10x40xf32>
    %28 = arith.mulf %26, %27 : vector<10x40xf32>
    %29 = arith.index_cast %arg0 : i32 to index
    %30 = memref.load %arg1[%29] : memref<2xf32, #tpu.memory_space<smem>>
    %cst_23 = arith.constant 0.00999999977 : f32
    %31 = arith.mulf %cst_23, %30 : f32
    %32 = arith.mulf %31, %31 : f32
    %cst_24 = arith.constant 3.000000e-02 : f32
    %33 = arith.mulf %cst_24, %30 : f32
    %34 = arith.mulf %33, %33 : f32
    %35 = arith.mulf %9, %9 : vector<10x40xf32>
    %36 = arith.subf %18, %35 : vector<10x40xf32>
    %cst_25 = arith.constant 1.02083337 : f32
    %37 = vector.broadcast %cst_25 : f32 to vector<10x40xf32>
    %38 = arith.mulf %37, %36 : vector<10x40xf32>
    %39 = arith.mulf %13, %13 : vector<10x40xf32>
    %40 = arith.subf %23, %39 : vector<10x40xf32>
    %cst_26 = arith.constant 1.02083337 : f32
    %41 = vector.broadcast %cst_26 : f32 to vector<10x40xf32>
    %42 = arith.mulf %41, %40 : vector<10x40xf32>
    %43 = arith.mulf %9, %13 : vector<10x40xf32>
    %44 = arith.subf %28, %43 : vector<10x40xf32>
    %cst_27 = arith.constant 1.02083337 : f32
    %45 = vector.broadcast %cst_27 : f32 to vector<10x40xf32>
    %46 = arith.mulf %45, %44 : vector<10x40xf32>
    %cst_28 = arith.constant 2.000000e+00 : f32
    %47 = vector.broadcast %cst_28 : f32 to vector<10x40xf32>
    %48 = arith.mulf %47, %9 : vector<10x40xf32>
    %49 = arith.mulf %48, %13 : vector<10x40xf32>
    %50 = vector.broadcast %32 : f32 to vector<10x40xf32>
    %51 = arith.addf %49, %50 : vector<10x40xf32>
    %cst_29 = arith.constant 2.000000e+00 : f32
    %52 = vector.broadcast %cst_29 : f32 to vector<10x40xf32>
    %53 = arith.mulf %52, %46 : vector<10x40xf32>
    %54 = vector.broadcast %34 : f32 to vector<10x40xf32>
    %55 = arith.addf %53, %54 : vector<10x40xf32>
    %56 = arith.mulf %9, %9 : vector<10x40xf32>
    %57 = arith.mulf %13, %13 : vector<10x40xf32>
    %58 = arith.addf %56, %57 : vector<10x40xf32>
    %59 = vector.broadcast %32 : f32 to vector<10x40xf32>
    %60 = arith.addf %58, %59 : vector<10x40xf32>
    %61 = arith.addf %38, %42 : vector<10x40xf32>
    %62 = vector.broadcast %34 : f32 to vector<10x40xf32>
    %63 = arith.addf %61, %62 : vector<10x40xf32>
    %64 = arith.mulf %60, %63 : vector<10x40xf32>
    %65 = tpu.reciprocal %64 {approx = true} : vector<10x40xf32> -> vector<10x40xf32>
    %66 = arith.mulf %64, %65 : vector<10x40xf32>
    %cst_30 = arith.constant 2.000000e+00 : f32
    %67 = vector.broadcast %cst_30 : f32 to vector<10x40xf32>
    %68 = arith.subf %67, %66 : vector<10x40xf32>
    %69 = arith.mulf %65, %68 : vector<10x40xf32>
    %70 = arith.mulf %51, %55 : vector<10x40xf32>
    %71 = arith.mulf %70, %69 : vector<10x40xf32>
    %cst_31 = arith.constant dense<0.000000e+00> : vector<40xf32>
    %72 = vector.multi_reduction <add>, %71, %cst_31 [0] : vector<10x40xf32> to vector<40xf32>
    %73 = vector.shape_cast %72 : vector<40xf32> to vector<1x40xf32>
    %c0_32 = arith.constant 0 : index
    %c0_33 = arith.constant 0 : index
    %c0_34 = arith.constant 0 : index
    %74 = vector.load %arg6[%c0_32, %c0_33, %c0_34] : memref<1x1x40xf32, #tpu.memory_space<vmem>>, vector<1x1x40xf32>
    %75 = vector.shape_cast %74 : vector<1x1x40xf32> to vector<1x40xf32>
    %76 = vector.shape_cast %73 : vector<1x40xf32> to vector<1x1x40xf32>
    tpu.vector_store %arg6[%c0_32, %c0_33, %c0_34], %76 {strides = array<i32>} : memref<1x1x40xf32, #tpu.memory_space<vmem>>, vector<1x1x40xf32>,
    return
  }
  func.func @transform_0(%arg0: i32, %arg1: memref<2xf32, #tpu.memory_space<smem>>) -> (i32, i32, i32) {
    %c0_i32 = arith.constant 0 : i32
    %c0_i32_0 = arith.constant 0 : i32
    %c0_i32_1 = arith.constant 0 : i32
    return %arg0, %c0_i32, %c0_i32_0 : i32, i32, i32
  }
  func.func @transform_1(%arg0: i32, %arg1: memref<2xf32, #tpu.memory_space<smem>>) -> (i32, i32, i32) {
    %c0_i32 = arith.constant 0 : i32
    %c0_i32_0 = arith.constant 0 : i32
    %c0_i32_1 = arith.constant 0 : i32
    return %arg0, %c0_i32, %c0_i32_0 : i32, i32, i32
  }
  func.func @transform_2(%arg0: i32, %arg1: memref<2xf32, #tpu.memory_space<smem>>) -> (i32, i32) {
    %c0_i32 = arith.constant 0 : i32
    %c0_i32_0 = arith.constant 0 : i32
    %c0_i32_1 = arith.constant 0 : i32
    return %c0_i32, %c0_i32_0 : i32, i32
  }
  func.func @transform_3(%arg0: i32, %arg1: memref<2xf32, #tpu.memory_space<smem>>) -> (i32, i32) {
    %c0_i32 = arith.constant 0 : i32
    %c0_i32_0 = arith.constant 0 : i32
    %c0_i32_1 = arith.constant 0 : i32
    return %c0_i32, %c0_i32_0 : i32, i32
  }
  func.func @transform_4(%arg0: i32, %arg1: memref<2xf32, #tpu.memory_space<smem>>) -> (i32, i32, i32) {
    %c0_i32 = arith.constant 0 : i32
    %c0_i32_0 = arith.constant 0 : i32
    %c0_i32_1 = arith.constant 0 : i32
    return %arg0, %c0_i32, %c0_i32_0 : i32, i32, i32
  }
}

</mosaic_0001>

<llo_original>
// kernel: tpu_custom_call.1
$region0: #{tpu_custom_call.1}
  #allocation0 [shape = 'u32[]', space=smem, size = 0x4, offset = 0x4, fixed_abs, tag = 'smem constant byte address 0x4 - core index']
  #allocation1 [shape = 'u32[144,128]{1,0:T(1,128)}', space=vmem, size = 0x12000, scoped, tag = 'internal scratch']
  #allocation2 [shape = 's32[1]{0}', space=sflag, size = 0x4, scoped, tag = 'scoped memory for tpu_custom_call.1']
  #allocation3 [shape = 'u8[512]{0}', space=smem, size = 0x200, scoped, tag = 'prefetched SMEM operand 0']
  %s0 = inlined_call_operand.vmem [shape: f32[2], index: 0, kind: input, shape index: {}]
  %s1 = inlined_call_operand.vmem [shape: f32[2,16,64], index: 1, kind: input, shape index: {}]
  %s2 = inlined_call_operand.vmem [shape: f32[2,16,64], index: 2, kind: input, shape index: {}]
  %s3 = inlined_call_operand.vmem [shape: f32[10,16], index: 3, kind: input, shape index: {}]
  %s4 = inlined_call_operand.vmem [shape: f32[64,40], index: 4, kind: input, shape index: {}]
  %s5 = inlined_call_operand.hbm [shape: f32[2,1,40], index: 5, kind: output, shape index: {}]
  %s6 = sld [smem:[#allocation0]]
  $region49: #{tpu_custom_call.1} parent=0
    _
  %s8 = ssub.s32 1, %s6
  %s9 = scalar_select 0, %s8, %s6
  %s10 = sshll.u32 %s0, 4
  %s11 = int_to_ptr.vmem [resolvable:$true] %s10
  %13 = dma.vmem_to_smem %s11, 16, [#allocation3], [#allocation2]
  %14 = dma.done [#allocation2], 16
  %15 = sfence
  $region1: #{tpu_custom_call.1} parent=0
    #allocation4 [shape = 'u8[1024]{0}', space=vmem, size = 0x400, scoped, tag = 'output window, operand 0']
    #allocation5 [shape = 's32[2]{0}', space=sflag, size = 0x8, scoped, tag = 'scoped memory for tpu_custom_call.1']
    %16 = vsyncpa [#allocation5], 0
    %s17 = scalar_lea.sflag [#allocation5], 1
    %18 = vsyncpa %s17, 0
    loop: start=0, step=1, limit=4
    $region2: #{tpu_custom_call.1} parent=1 // loop_pre_header
      _
    $region3: #{tpu_custom_call.1} parent=1 // loop_header
      %s20 = sphi 0, %s24
      %p21 = scmp.ge.s32.totalorder %s20, 4
      %s30 = sphi 0, %s32
      %s33 = sphi 0, %s30
      %s34 = sphi 0, %s33
      %s50 = sphi 0, %s34
      %s56 = sphi 0, %s58
      %s59 = sphi 0, %s56
      %s60 = sphi 0, %s59
      %s76 = sphi 0, %s60
      %s80 = sphi 0, %s80
      %s82 = sphi 0, %s80
      %s83 = sphi 0, %s82
      %s97 = sphi 0, %s83
      %s101 = sphi 0, %s101
      %s103 = sphi 0, %s101
      %s104 = sphi 0, %s103
      %s118 = sphi 0, %s104
      %s124 = sphi 0, %s126
      %s127 = sphi 0, %s124
      %s128 = sphi 0, %s127
      %s144 = sphi 0, %s128
    $region4: #{tpu_custom_call.1} parent=1 // loop_header_branch
      %23 = sbr.rel (%p21) target = $region8
    $region5: #{tpu_custom_call.1} parent=1 // loop_body
      %s25 = ssub.s32 %s20, 1
      %s26 = ssub.s32 %s20, 2
      %s27 = sadd.s32 %s20, 1
      %s28 = ssub.s32 %s20, %s27
      %p29 = scmp.eq.s32.totalorder %s28, 0
      %s31 = sadd.s32 %s30, 1
      %s32 = scalar_select %p29, %s30, %s31
      %p35 = pneg %p29
      %p36 = scmp.eq.s32.totalorder %s20, 1
      %p37 = por %p35, %p36
      %p38 = scmp.ne.s32.totalorder %s30, %s33
      %p39 = scmp.eq.s32.totalorder %s20, 0
      %p40 = por %p38, %p39
      %p41 = scmp.ne.s32.totalorder %s30, %s33
      %p42 = scmp.eq.s32.totalorder %s25, 1
      %p43 = por %p41, %p42
      %p44 = scmp.ne.s32.totalorder %s33, %s34
      %p45 = scmp.eq.s32.totalorder %s25, 0
      %p46 = por %p44, %p45
      %p47 = scmp.ne.s32.totalorder %s33, %s34
      %p48 = scmp.eq.s32.totalorder %s26, 1
      %p49 = por %p47, %p48
      %p51 = scmp.ne.s32.totalorder %s34, %s50
      %p52 = scmp.eq.s32.totalorder %s26, 0
      %p53 = por %p51, %p52
      %s54 = ssub.s32 %s20, %s27
      %p55 = scmp.eq.s32.totalorder %s54, 0
      %s57 = sadd.s32 %s56, 1
      %s58 = scalar_select %p55, %s56, %s57
      %p61 = pneg %p55
      %p62 = scmp.eq.s32.totalorder %s20, 1
      %p63 = por %p61, %p62
      %p64 = scmp.ne.s32.totalorder %s56, %s59
      %p65 = scmp.eq.s32.totalorder %s20, 0
      %p66 = por %p64, %p65
      %p67 = scmp.ne.s32.totalorder %s56, %s59
      %p68 = scmp.eq.s32.totalorder %s25, 1
      %p69 = por %p67, %p68
      %p70 = scmp.ne.s32.totalorder %s59, %s60
      %p71 = scmp.eq.s32.totalorder %s25, 0
      %p72 = por %p70, %p71
      %p73 = scmp.ne.s32.totalorder %s59, %s60
      %p74 = scmp.eq.s32.totalorder %s26, 1
      %p75 = por %p73, %p74
      %p77 = scmp.ne.s32.totalorder %s60, %s76
      %p78 = scmp.eq.s32.totalorder %s26, 0
      %p79 = por %p77, %p78
      %s81 = sadd.s32 %s80, 1
      %p84 = scmp.eq.s32.totalorder %s20, 1
      %p85 = scmp.ne.s32.totalorder %s80, %s82
      %p86 = scmp.eq.s32.totalorder %s20, 0
      %p87 = por %p85, %p86
      %p88 = scmp.ne.s32.totalorder %s80, %s82
      %p89 = scmp.eq.s32.totalorder %s25, 1
      %p90 = por %p88, %p89
      %p91 = scmp.ne.s32.totalorder %s82, %s83
      %p92 = scmp.eq.s32.totalorder %s25, 0
      %p93 = por %p91, %p92
      %p94 = scmp.ne.s32.totalorder %s82, %s83
      %p95 = scmp.eq.s32.totalorder %s26, 1
      %p96 = por %p94, %p95
      %p98 = scmp.ne.s32.totalorder %s83, %s97
      %p99 = scmp.eq.s32.totalorder %s26, 0
      %p100 = por %p98, %p99
      %s102 = sadd.s32 %s101, 1
      %p105 = scmp.eq.s32.totalorder %s20, 1
      %p106 = scmp.ne.s32.totalorder %s101, %s103
      %p107 = scmp.eq.s32.totalorder %s20, 0
      %p108 = por %p106, %p107
      %p109 = scmp.ne.s32.totalorder %s101, %s103
      %p110 = scmp.eq.s32.totalorder %s25, 1
      %p111 = por %p109, %p110
      %p112 = scmp.ne.s32.totalorder %s103, %s104
      %p113 = scmp.eq.s32.totalorder %s25, 0
      %p114 = por %p112, %p113
      %p115 = scmp.ne.s32.totalorder %s103, %s104
      %p116 = scmp.eq.s32.totalorder %s26, 1
      %p117 = por %p115, %p116
      %p119 = scmp.ne.s32.totalorder %s104, %s118
      %p120 = scmp.eq.s32.totalorder %s26, 0
      %p121 = por %p119, %p120
      %s122 = ssub.s32 %s20, %s27
      %p123 = scmp.eq.s32.totalorder %s122, 0
      %s125 = sadd.s32 %s124, 1
      %s126 = scalar_select %p123, %s124, %s125
      %p129 = pneg %p123
      %p130 = scmp.eq.s32.totalorder %s20, 1
      %p131 = por %p129, %p130
      %p132 = scmp.ne.s32.totalorder %s124, %s127
      %p133 = scmp.eq.s32.totalorder %s20, 0
      %p134 = por %p132, %p133
      %p135 = scmp.ne.s32.totalorder %s124, %s127
      %p136 = scmp.eq.s32.totalorder %s25, 1
      %p137 = por %p135, %p136
      %p138 = scmp.ne.s32.totalorder %s127, %s128
      %p139 = scmp.eq.s32.totalorder %s25, 0
      %p140 = por %p138, %p139
      %p141 = scmp.ne.s32.totalorder %s127, %s128
      %p142 = scmp.eq.s32.totalorder %s26, 1
      %p143 = por %p141, %p142
      %p145 = scmp.ne.s32.totalorder %s128, %s144
      %p146 = scmp.eq.s32.totalorder %s26, 0
      %p147 = por %p145, %p146
      %p148 = scmp.le.s32.totalorder 1, %s20
      %p149 = scmp.lt.s32.totalorder %s20, 3
      %p150 = pnand %p148, %p149
      %p151 = pneg %p150
      // Predicated region
      $region9: #{tpu_custom_call.1} parent=5 // pred_check
        _
      $region10: #{tpu_custom_call.1} parent=5 // pred_check_branch
        %153 = sbr.rel (%p150) target = $region12
      $region11: #{tpu_custom_call.1} parent=5 // pred_region
        %s154 = ssub.s32 %s20, 1
        // Predicated region
        $region13: #{tpu_custom_call.1} parent=11 // pred_check
          %p155 = pneg %p93
        $region14: #{tpu_custom_call.1} parent=11 // pred_check_branch
          %157 = sbr.rel (%p155) target = $region16
        $region15: #{tpu_custom_call.1} parent=11 // pred_region
          _
        $region16: #{tpu_custom_call.1} parent=11 // pred_fallthru
          _
        // Predicated region
        $region17: #{tpu_custom_call.1} parent=11 // pred_check
          %p158 = pneg %p114
        $region18: #{tpu_custom_call.1} parent=11 // pred_check_branch
          %160 = sbr.rel (%p158) target = $region20
        $region19: #{tpu_custom_call.1} parent=11 // pred_region
          _
        $region20: #{tpu_custom_call.1} parent=11 // pred_fallthru
          _
      $region12: #{tpu_custom_call.1} parent=5 // pred_fallthru
        _
      %p161 = scmp.lt.s32.totalorder %s20, 2
      // Predicated region
      $region21: #{tpu_custom_call.1} parent=5 // pred_check
        %p162 = pneg %p161
      $region22: #{tpu_custom_call.1} parent=5 // pred_check_branch
        %164 = sbr.rel (%p162) target = $region24
      $region23: #{tpu_custom_call.1} parent=5 // pred_region
        // Predicated region
        $region25: #{tpu_custom_call.1} parent=23 // pred_check
          %p165 = pneg %p40
        $region26: #{tpu_custom_call.1} parent=23 // pred_check_branch
          %167 = sbr.rel (%p165) target = $region28
        $region27: #{tpu_custom_call.1} parent=23 // pred_region
          %p168 = scmp.lt.s32.totalorder %s20, 1
          %s169 = scalar_select %p168, %s20, 1
          %s170 = smul.addr %s169, 2
          %s171 = smul.addr %s170, 8
          %s172 = scalar_lea.vmem %s1, %s171
        $region28: #{tpu_custom_call.1} parent=23 // pred_fallthru
          _
        // Predicated region
        $region29: #{tpu_custom_call.1} parent=23 // pred_check
          %p173 = pneg %p66
        $region30: #{tpu_custom_call.1} parent=23 // pred_check_branch
          %175 = sbr.rel (%p173) target = $region32
        $region31: #{tpu_custom_call.1} parent=23 // pred_region
          %p176 = scmp.lt.s32.totalorder %s20, 1
          %s177 = scalar_select %p176, %s20, 1
          %s178 = smul.addr %s177, 2
          %s179 = smul.addr %s178, 8
          %s180 = scalar_lea.vmem %s2, %s179
        $region32: #{tpu_custom_call.1} parent=23 // pred_fallthru
          _
      $region24: #{tpu_custom_call.1} parent=5 // pred_fallthru
        _
      %p181 = scmp.le.s32.totalorder 1, %s20
      %p182 = scmp.lt.s32.totalorder %s20, 3
      %p183 = pnand %p181, %p182
      %p184 = pneg %p183
      // Predicated region
      $region33: #{tpu_custom_call.1} parent=5 // pred_check
        _
      $region34: #{tpu_custom_call.1} parent=5 // pred_check_branch
        %186 = sbr.rel (%p183) target = $region36
      $region35: #{tpu_custom_call.1} parent=5 // pred_region
        %s187 = ssub.s32 %s20, 1
        %p188 = scmp.lt.s32.totalorder %s25, 1
        %s189 = scalar_select %p188, %s25, 1
        %s190 = smul.addr %s189, 2
        %s191 = smul.addr %s190, 8
        %s192 = scalar_lea.vmem %s1, %s191
        %p193 = pneg %p46
        %p194 = pneg %p43
        %p195 = scmp.lt.s32.totalorder %s25, 1
        %s196 = scalar_select %p195, %s25, 1
        %s197 = smul.addr %s196, 2
        %s198 = smul.addr %s197, 8
        %s199 = scalar_lea.vmem %s2, %s198
        %p200 = pneg %p72
        %p201 = pneg %p69
        %p202 = pneg %p93
        %p203 = pneg %p90
        %p204 = pneg %p114
        %p205 = pneg %p111
        %p206 = pneg %p140
        %p207 = pneg %p137
        %s208 = sand.u32 %s127, 1
        %s209 = scalar_lea.sflag [#allocation5], %s208
        %s210 = sand.u32 %s127, 1
        %s211 = scalar_lea.vmem [#allocation4], %s210
        %p212 = scmp.lt.s32.totalorder %s25, 1
        %s213 = scalar_select %p212, %s25, 1
        %s214 = smul.addr %s213, 2
        %s215 = smul.addr %s214, 8
        %s216 = scalar_lea.vmem %s1, %s215
        %p217 = scmp.lt.s32.totalorder %s25, 1
        %s218 = scalar_select %p217, %s25, 1
        %s219 = smul.addr %s218, 2
        %s220 = smul.addr %s219, 8
        %s221 = scalar_lea.vmem %s2, %s220
        %v222 = vld [vmem:[%s216] sm:$0xff]
        %v223 = vld [vmem:[%s216 + $0x8] sm:$0xff]
        %v224 = vld [vmem:[%s221] sm:$0xff]
        %v225 = vld [vmem:[%s221 + $0x8] sm:$0xff]
        %v226 = vld [vmem:[%s3] sm:$0xff]
        %v227 = vld [vmem:[%s3 + $0x8] sm:$0x3]
        %v228 = vld [vmem:[%s4] sm:$0xff]
        %v229 = vld [vmem:[%s4 + $0x8] sm:$0xff]
        %v230 = vld [vmem:[%s4 + $0x10] sm:$0xff]
        %v231 = vld [vmem:[%s4 + $0x18] sm:$0xff]
        %v232 = vld [vmem:[%s4 + $0x20] sm:$0xff]
        %v233 = vld [vmem:[%s4 + $0x28] sm:$0xff]
        %v234 = vld [vmem:[%s4 + $0x30] sm:$0xff]
        %v235 = vld [vmem:[%s4 + $0x38] sm:$0xff]
        %vm236 = vcmask 130048
        %v238 = vsel %vm236, %v226, 0
        %v241 = vsel %vm236, %v227, 0
        %243 = vmatprep.subr.mxu0 0.0
        %244 = vmatpush1.msra.mxu0 %v222
        %245 = vmatprep.subr.mxu0 0.0
        %246 = vmatpush1.msra.mxu0 %v223
        %247 = vmatprep.subr.mxu0 0.0
        %248 = vmatpush1.msra.mxu0 0.0
        %249 = vmatprep.subr.mxu0 0.0
        %250 = vmatpush1.msra.mxu0 0.0
        %251 = vmatprep.subr.mxu0 0.0
        %252 = vmatpush1.msra.mxu0 0.0
        %253 = vmatprep.subr.mxu0 0.0
        %254 = vmatpush1.msra.mxu0 0.0
        %255 = vmatprep.subr.mxu0 0.0
        %256 = vmatpush1.msra.mxu0 0.0
        %257 = vmatprep.subr.mxu0 0.0
        %258 = vmatpush1.msra.mxu0 0.0
        %259 = vmatprep.subr.mxu0 0.0
        %260 = vmatpush1.msra.mxu0 0.0
        %261 = vmatprep.subr.mxu0 0.0
        %262 = vmatpush1.msra.mxu0 0.0
        %263 = vmatprep.subr.mxu0 0.0
        %264 = vmatpush1.msra.mxu0 0.0
        %265 = vmatprep.subr.mxu0 0.0
        %266 = vmatpush1.msra.mxu0 0.0
        %267 = vmatprep.subr.mxu0 0.0
        %268 = vmatpush1.msra.mxu0 0.0
        %269 = vmatprep.subr.mxu0 0.0
        %270 = vmatpush1.msra.mxu0 0.0
        %271 = vmatprep.subr.mxu0 0.0
        %272 = vmatpush1.msra.mxu0 0.0
        %273 = vmatprep.subr.mxu0 0.0
        %274 = vmatpush1.msra.mxu0 0.0
        %275 = vmatprep.subr.mxu0 0.0
        %276 = vmatpush1.msra.mxu0 0.0
        %277 = vmatprep.subr.mxu0 0.0
        %278 = vmatpush1.msra.mxu0 0.0
        %279 = vmatprep.subr.mxu0 0.0
        %280 = vmatpush1.msra.mxu0 0.0
        %281 = vmatprep.subr.mxu0 0.0
        %282 = vmatpush1.msra.mxu0 0.0
        %283 = vmatprep.subr.mxu0 0.0
        %284 = vmatpush1.msra.mxu0 0.0
        %285 = vmatprep.subr.mxu0 0.0
        %286 = vmatpush1.msra.mxu0 0.0
        %287 = vmatprep.subr.mxu0 0.0
        %288 = vmatpush1.msra.mxu0 0.0
        %289 = vmatprep.subr.mxu0 0.0
        %290 = vmatpush1.msra.mxu0 0.0
        %291 = vmatprep.subr.mxu0 0.0
        %292 = vmatpush1.msra.mxu0 0.0
        %293 = vmatprep.subr.mxu0 0.0
        %294 = vmatpush1.msra.mxu0 0.0
        %295 = vmatprep.subr.mxu0 0.0
        %296 = vmatpush1.msra.mxu0 0.0
        %297 = vmatprep.subr.mxu0 0.0
        %298 = vmatpush1.msra.mxu0 0.0
        %299 = vmatprep.subr.mxu0 0.0
        %300 = vmatpush1.msra.mxu0 0.0
        %301 = vmatprep.subr.mxu0 0.0
        %302 = vmatpush1.msra.mxu0 0.0
        %303 = vmatprep.subr.mxu0 0.0
        %304 = vmatpush1.msra.mxu0 0.0
        %305 = vmatprep.subr.mxu0 0.0
        %306 = vmatpush1.msra.mxu0 0.0
        %307 = vmatprep.mubr.f32.mxu0 0.0
        %308 = vmatmul.mubr.f32.gmra.mrb[0].mxu0 %v238
        %v309 = vpop.f32.mrb[0].mxu0
        %v310 = vadd.f32 0.0, %v309
        %v311 = vpop.f32.mrb[0].mxu0
        %312 = vmatprep.mubr.f32.mxu0 0.0
        %313 = vmatmul.mubr.f32.gmra.mrb[0].mxu0 %v241
        %v314 = vpop.f32.mrb[0].mxu0
        %v315 = vadd.f32 0.0, %v314
        %v316 = vpop.f32.mrb[0].mxu0
        %317 = vdwg.mxu0
        %vm318 = vcmask 523264
        %v320 = vsel %vm318, %v310, 0
        %v323 = vsel %vm318, %v315, 0
        %325 = vmatprep.subr.mxu0 0.0
        %326 = vmatpush1.msra.mxu0 %v228
        %327 = vmatprep.subr.mxu0 0.0
        %328 = vmatpush1.msra.mxu0 %v229
        %329 = vmatprep.subr.mxu0 0.0
        %330 = vmatpush1.msra.mxu0 %v230
        %331 = vmatprep.subr.mxu0 0.0
        %332 = vmatpush1.msra.mxu0 %v231
        %333 = vmatprep.subr.mxu0 0.0
        %334 = vmatpush1.msra.mxu0 %v232
        %335 = vmatprep.subr.mxu0 0.0
        %336 = vmatpush1.msra.mxu0 %v233
        %337 = vmatprep.subr.mxu0 0.0
        %338 = vmatpush1.msra.mxu0 %v234
        %339 = vmatprep.subr.mxu0 0.0
        %340 = vmatpush1.msra.mxu0 %v235
        %341 = vmatprep.subr.mxu0 0.0
        %342 = vmatpush1.msra.mxu0 0.0
        %343 = vmatprep.subr.mxu0 0.0
        %344 = vmatpush1.msra.mxu0 0.0
        %345 = vmatprep.subr.mxu0 0.0
        %346 = vmatpush1.msra.mxu0 0.0
        %347 = vmatprep.subr.mxu0 0.0
        %348 = vmatpush1.msra.mxu0 0.0
        %349 = vmatprep.subr.mxu0 0.0
        %350 = vmatpush1.msra.mxu0 0.0
        %351 = vmatprep.subr.mxu0 0.0
        %352 = vmatpush1.msra.mxu0 0.0
        %353 = vmatprep.subr.mxu0 0.0
        %354 = vmatpush1.msra.mxu0 0.0
        %355 = vmatprep.subr.mxu0 0.0
        %356 = vmatpush1.msra.mxu0 0.0
        %357 = vmatprep.subr.mxu0 0.0
        %358 = vmatpush1.msra.mxu0 0.0
        %359 = vmatprep.subr.mxu0 0.0
        %360 = vmatpush1.msra.mxu0 0.0
        %361 = vmatprep.subr.mxu0 0.0
        %362 = vmatpush1.msra.mxu0 0.0
        %363 = vmatprep.subr.mxu0 0.0
        %364 = vmatpush1.msra.mxu0 0.0
        %365 = vmatprep.subr.mxu0 0.0
        %366 = vmatpush1.msra.mxu0 0.0
        %367 = vmatprep.subr.mxu0 0.0
        %368 = vmatpush1.msra.mxu0 0.0
        %369 = vmatprep.subr.mxu0 0.0
        %370 = vmatpush1.msra.mxu0 0.0
        %371 = vmatprep.subr.mxu0 0.0
        %372 = vmatpush1.msra.mxu0 0.0
        %373 = vmatprep.subr.mxu0 0.0
        %374 = vmatpush1.msra.mxu0 0.0
        %375 = vmatprep.subr.mxu0 0.0
        %376 = vmatpush1.msra.mxu0 0.0
        %377 = vmatprep.subr.mxu0 0.0
        %378 = vmatpush1.msra.mxu0 0.0
        %379 = vmatprep.subr.mxu0 0.0
        %380 = vmatpush1.msra.mxu0 0.0
        %381 = vmatprep.subr.mxu0 0.0
        %382 = vmatpush1.msra.mxu0 0.0
        %383 = vmatprep.subr.mxu0 0.0
        %384 = vmatpush1.msra.mxu0 0.0
        %385 = vmatprep.subr.mxu0 0.0
        %386 = vmatpush1.msra.mxu0 0.0
        %387 = vmatprep.subr.mxu0 0.0
        %388 = vmatpush1.msra.mxu0 0.0
        %389 = vmatprep.mubr.f32.mxu0 0.0
        %390 = vmatmul.mubr.f32.gmra.mrb[0].mxu0 %v320
        %v391 = vpop.f32.mrb[0].mxu0
        %v392 = vadd.f32 0.0, %v391
        %v393 = vpop.f32.mrb[0].mxu0
        %394 = vmatprep.mubr.f32.mxu0 0.0
        %395 = vmatmul.mubr.f32.gmra.mrb[0].mxu0 %v323
        %v396 = vpop.f32.mrb[0].mxu0
        %v397 = vadd.f32 0.0, %v396
        %v398 = vpop.f32.mrb[0].mxu0
        %399 = vdwg.mxu0
        %v400 = vmul.f32 %v392, 0.020408163
        %v401 = vmul.f32 %v397, 0.020408163
        %402 = vmatprep.subr.mxu0 0.0
        %403 = vmatpush1.msra.mxu0 %v224
        %404 = vmatprep.subr.mxu0 0.0
        %405 = vmatpush1.msra.mxu0 %v225
        %406 = vmatprep.subr.mxu0 0.0
        %407 = vmatpush1.msra.mxu0 0.0
        %408 = vmatprep.subr.mxu0 0.0
        %409 = vmatpush1.msra.mxu0 0.0
        %410 = vmatprep.subr.mxu0 0.0
        %411 = vmatpush1.msra.mxu0 0.0
        %412 = vmatprep.subr.mxu0 0.0
        %413 = vmatpush1.msra.mxu0 0.0
        %414 = vmatprep.subr.mxu0 0.0
        %415 = vmatpush1.msra.mxu0 0.0
        %416 = vmatprep.subr.mxu0 0.0
        %417 = vmatpush1.msra.mxu0 0.0
        %418 = vmatprep.subr.mxu0 0.0
        %419 = vmatpush1.msra.mxu0 0.0
        %420 = vmatprep.subr.mxu0 0.0
        %421 = vmatpush1.msra.mxu0 0.0
        %422 = vmatprep.subr.mxu0 0.0
        %423 = vmatpush1.msra.mxu0 0.0
        %424 = vmatprep.subr.mxu0 0.0
        %425 = vmatpush1.msra.mxu0 0.0
        %426 = vmatprep.subr.mxu0 0.0
        %427 = vmatpush1.msra.mxu0 0.0
        %428 = vmatprep.subr.mxu0 0.0
        %429 = vmatpush1.msra.mxu0 0.0
        %430 = vmatprep.subr.mxu0 0.0
        %431 = vmatpush1.msra.mxu0 0.0
        %432 = vmatprep.subr.mxu0 0.0
        %433 = vmatpush1.msra.mxu0 0.0
        %434 = vmatprep.subr.mxu0 0.0
        %435 = vmatpush1.msra.mxu0 0.0
        %436 = vmatprep.subr.mxu0 0.0
        %437 = vmatpush1.msra.mxu0 0.0
        %438 = vmatprep.subr.mxu0 0.0
        %439 = vmatpush1.msra.mxu0 0.0
        %440 = vmatprep.subr.mxu0 0.0
        %441 = vmatpush1.msra.mxu0 0.0
        %442 = vmatprep.subr.mxu0 0.0
        %443 = vmatpush1.msra.mxu0 0.0
        %444 = vmatprep.subr.mxu0 0.0
        %445 = vmatpush1.msra.mxu0 0.0
        %446 = vmatprep.subr.mxu0 0.0
        %447 = vmatpush1.msra.mxu0 0.0
        %448 = vmatprep.subr.mxu0 0.0
        %449 = vmatpush1.msra.mxu0 0.0
        %450 = vmatprep.subr.mxu0 0.0
        %451 = vmatpush1.msra.mxu0 0.0
        %452 = vmatprep.subr.mxu0 0.0
        %453 = vmatpush1.msra.mxu0 0.0
        %454 = vmatprep.subr.mxu0 0.0
        %455 = vmatpush1.msra.mxu0 0.0
        %456 = vmatprep.subr.mxu0 0.0
        %457 = vmatpush1.msra.mxu0 0.0
        %458 = vmatprep.subr.mxu0 0.0
        %459 = vmatpush1.msra.mxu0 0.0
        %460 = vmatprep.subr.mxu0 0.0
        %461 = vmatpush1.msra.mxu0 0.0
        %462 = vmatprep.subr.mxu0 0.0
        %463 = vmatpush1.msra.mxu0 0.0
        %464 = vmatprep.subr.mxu0 0.0
        %465 = vmatpush1.msra.mxu0 0.0
        %466 = vmatprep.mubr.f32.mxu0 0.0
        %467 = vmatmul.mubr.f32.gmra.mrb[0].mxu0 %v238
        %v468 = vpop.f32.mrb[0].mxu0
        %v469 = vadd.f32 0.0, %v468
        %v470 = vpop.f32.mrb[0].mxu0
        %471 = vmatprep.mubr.f32.mxu0 0.0
        %472 = vmatmul.mubr.f32.gmra.mrb[0].mxu0 %v241
        %v473 = vpop.f32.mrb[0].mxu0
        %v474 = vadd.f32 0.0, %v473
        %v475 = vpop.f32.mrb[0].mxu0
        %476 = vdwg.mxu0
        %v478 = vsel %vm318, %v469, 0
        %v481 = vsel %vm318, %v474, 0
        %483 = vmatprep.subr.mxu0 0.0
        %484 = vmatpush1.msra.mxu0 %v228
        %485 = vmatprep.subr.mxu0 0.0
        %486 = vmatpush1.msra.mxu0 %v229
        %487 = vmatprep.subr.mxu0 0.0
        %488 = vmatpush1.msra.mxu0 %v230
        %489 = vmatprep.subr.mxu0 0.0
        %490 = vmatpush1.msra.mxu0 %v231
        %491 = vmatprep.subr.mxu0 0.0
        %492 = vmatpush1.msra.mxu0 %v232
        %493 = vmatprep.subr.mxu0 0.0
        %494 = vmatpush1.msra.mxu0 %v233
        %495 = vmatprep.subr.mxu0 0.0
        %496 = vmatpush1.msra.mxu0 %v234
        %497 = vmatprep.subr.mxu0 0.0
        %498 = vmatpush1.msra.mxu0 %v235
        %499 = vmatprep.subr.mxu0 0.0
        %500 = vmatpush1.msra.mxu0 0.0
        %501 = vmatprep.subr.mxu0 0.0
        %502 = vmatpush1.msra.mxu0 0.0
        %503 = vmatprep.subr.mxu0 0.0
        %504 = vmatpush1.msra.mxu0 0.0
        %505 = vmatprep.subr.mxu0 0.0
        %506 = vmatpush1.msra.mxu0 0.0
        %507 = vmatprep.subr.mxu0 0.0
        %508 = vmatpush1.msra.mxu0 0.0
        %509 = vmatprep.subr.mxu0 0.0
        %510 = vmatpush1.msra.mxu0 0.0
        %511 = vmatprep.subr.mxu0 0.0
        %512 = vmatpush1.msra.mxu0 0.0
        %513 = vmatprep.subr.mxu0 0.0
        %514 = vmatpush1.msra.mxu0 0.0
        %515 = vmatprep.subr.mxu0 0.0
        %516 = vmatpush1.msra.mxu0 0.0
        %517 = vmatprep.subr.mxu0 0.0
        %518 = vmatpush1.msra.mxu0 0.0
        %519 = vmatprep.subr.mxu0 0.0
        %520 = vmatpush1.msra.mxu0 0.0
        %521 = vmatprep.subr.mxu0 0.0
        %522 = vmatpush1.msra.mxu0 0.0
        %523 = vmatprep.subr.mxu0 0.0
        %524 = vmatpush1.msra.mxu0 0.0
        %525 = vmatprep.subr.mxu0 0.0
        %526 = vmatpush1.msra.mxu0 0.0
        %527 = vmatprep.subr.mxu0 0.0
        %528 = vmatpush1.msra.mxu0 0.0
        %529 = vmatprep.subr.mxu0 0.0
        %530 = vmatpush1.msra.mxu0 0.0
        %531 = vmatprep.subr.mxu0 0.0
        %532 = vmatpush1.msra.mxu0 0.0
        %533 = vmatprep.subr.mxu0 0.0
        %534 = vmatpush1.msra.mxu0 0.0
        %535 = vmatprep.subr.mxu0 0.0
        %536 = vmatpush1.msra.mxu0 0.0
        %537 = vmatprep.subr.mxu0 0.0
        %538 = vmatpush1.msra.mxu0 0.0
        %539 = vmatprep.subr.mxu0 0.0
        %540 = vmatpush1.msra.mxu0 0.0
        %541 = vmatprep.subr.mxu0 0.0
        %542 = vmatpush1.msra.mxu0 0.0
        %543 = vmatprep.subr.mxu0 0.0
        %544 = vmatpush1.msra.mxu0 0.0
        %545 = vmatprep.subr.mxu0 0.0
        %546 = vmatpush1.msra.mxu0 0.0
        %547 = vmatprep.mubr.f32.mxu0 0.0
        %548 = vmatmul.mubr.f32.gmra.mrb[0].mxu0 %v478
        %v549 = vpop.f32.mrb[0].mxu0
        %v550 = vadd.f32 0.0, %v549
        %v551 = vpop.f32.mrb[0].mxu0
        %552 = vmatprep.mubr.f32.mxu0 0.0
        %553 = vmatmul.mubr.f32.gmra.mrb[0].mxu0 %v481
        %v554 = vpop.f32.mrb[0].mxu0
        %v555 = vadd.f32 0.0, %v554
        %v556 = vpop.f32.mrb[0].mxu0
        %557 = vdwg.mxu0
        %v558 = vmul.f32 %v550, 0.020408163
        %v559 = vmul.f32 %v555, 0.020408163
        %v560 = vmul.f32 %v222, %v222
        %v561 = vmul.f32 %v223, %v223
        %562 = vmatprep.subr.mxu0 0.0
        %563 = vmatpush1.msra.mxu0 %v560
        %564 = vmatprep.subr.mxu0 0.0
        %565 = vmatpush1.msra.mxu0 %v561
        %566 = vmatprep.subr.mxu0 0.0
        %567 = vmatpush1.msra.mxu0 0.0
        %568 = vmatprep.subr.mxu0 0.0
        %569 = vmatpush1.msra.mxu0 0.0
        %570 = vmatprep.subr.mxu0 0.0
        %571 = vmatpush1.msra.mxu0 0.0
        %572 = vmatprep.subr.mxu0 0.0
        %573 = vmatpush1.msra.mxu0 0.0
        %574 = vmatprep.subr.mxu0 0.0
        %575 = vmatpush1.msra.mxu0 0.0
        %576 = vmatprep.subr.mxu0 0.0
        %577 = vmatpush1.msra.mxu0 0.0
        %578 = vmatprep.subr.mxu0 0.0
        %579 = vmatpush1.msra.mxu0 0.0
        %580 = vmatprep.subr.mxu0 0.0
        %581 = vmatpush1.msra.mxu0 0.0
        %582 = vmatprep.subr.mxu0 0.0
        %583 = vmatpush1.msra.mxu0 0.0
        %584 = vmatprep.subr.mxu0 0.0
        %585 = vmatpush1.msra.mxu0 0.0
        %586 = vmatprep.subr.mxu0 0.0
        %587 = vmatpush1.msra.mxu0 0.0
        %588 = vmatprep.subr.mxu0 0.0
        %589 = vmatpush1.msra.mxu0 0.0
        %590 = vmatprep.subr.mxu0 0.0
        %591 = vmatpush1.msra.mxu0 0.0
        %592 = vmatprep.subr.mxu0 0.0
        %593 = vmatpush1.msra.mxu0 0.0
        %594 = vmatprep.subr.mxu0 0.0
        %595 = vmatpush1.msra.mxu0 0.0
        %596 = vmatprep.subr.mxu0 0.0
        %597 = vmatpush1.msra.mxu0 0.0
        %598 = vmatprep.subr.mxu0 0.0
        %599 = vmatpush1.msra.mxu0 0.0
        %600 = vmatprep.subr.mxu0 0.0
        %601 = vmatpush1.msra.mxu0 0.0
        %602 = vmatprep.subr.mxu0 0.0
        %603 = vmatpush1.msra.mxu0 0.0
        %604 = vmatprep.subr.mxu0 0.0
        %605 = vmatpush1.msra.mxu0 0.0
        %606 = vmatprep.subr.mxu0 0.0
        %607 = vmatpush1.msra.mxu0 0.0
        %608 = vmatprep.subr.mxu0 0.0
        %609 = vmatpush1.msra.mxu0 0.0
        %610 = vmatprep.subr.mxu0 0.0
        %611 = vmatpush1.msra.mxu0 0.0
        %612 = vmatprep.subr.mxu0 0.0
        %613 = vmatpush1.msra.mxu0 0.0
        %614 = vmatprep.subr.mxu0 0.0
        %615 = vmatpush1.msra.mxu0 0.0
        %616 = vmatprep.subr.mxu0 0.0
        %617 = vmatpush1.msra.mxu0 0.0
        %618 = vmatprep.subr.mxu0 0.0
        %619 = vmatpush1.msra.mxu0 0.0
        %620 = vmatprep.subr.mxu0 0.0
        %621 = vmatpush1.msra.mxu0 0.0
        %622 = vmatprep.subr.mxu0 0.0
        %623 = vmatpush1.msra.mxu0 0.0
        %624 = vmatprep.subr.mxu0 0.0
        %625 = vmatpush1.msra.mxu0 0.0
        %626 = vmatprep.mubr.f32.mxu0 0.0
        %627 = vmatmul.mubr.f32.gmra.mrb[0].mxu0 %v238
        %v628 = vpop.f32.mrb[0].mxu0
        %v629 = vadd.f32 0.0, %v628
        %v630 = vpop.f32.mrb[0].mxu0
        %631 = vmatprep.mubr.f32.mxu0 0.0
        %632 = vmatmul.mubr.f32.gmra.mrb[0].mxu0 %v241
        %v633 = vpop.f32.mrb[0].mxu0
        %v634 = vadd.f32 0.0, %v633
        %v635 = vpop.f32.mrb[0].mxu0
        %636 = vdwg.mxu0
        %v638 = vsel %vm318, %v629, 0
        %v641 = vsel %vm318, %v634, 0
        %643 = vmatprep.subr.mxu0 0.0
        %644 = vmatpush1.msra.mxu0 %v228
        %645 = vmatprep.subr.mxu0 0.0
        %646 = vmatpush1.msra.mxu0 %v229
        %647 = vmatprep.subr.mxu0 0.0
        %648 = vmatpush1.msra.mxu0 %v230
        %649 = vmatprep.subr.mxu0 0.0
        %650 = vmatpush1.msra.mxu0 %v231
        %651 = vmatprep.subr.mxu0 0.0
        %652 = vmatpush1.msra.mxu0 %v232
        %653 = vmatprep.subr.mxu0 0.0
        %654 = vmatpush1.msra.mxu0 %v233
        %655 = vmatprep.subr.mxu0 0.0
        %656 = vmatpush1.msra.mxu0 %v234
        %657 = vmatprep.subr.mxu0 0.0
        %658 = vmatpush1.msra.mxu0 %v235
        %659 = vmatprep.subr.mxu0 0.0
        %660 = vmatpush1.msra.mxu0 0.0
        %661 = vmatprep.subr.mxu0 0.0
        %662 = vmatpush1.msra.mxu0 0.0
        %663 = vmatprep.subr.mxu0 0.0
        %664 = vmatpush1.msra.mxu0 0.0
        %665 = vmatprep.subr.mxu0 0.0
        %666 = vmatpush1.msra.mxu0 0.0
        %667 = vmatprep.subr.mxu0 0.0
        %668 = vmatpush1.msra.mxu0 0.0
        %669 = vmatprep.subr.mxu0 0.0
        %670 = vmatpush1.msra.mxu0 0.0
        %671 = vmatprep.subr.mxu0 0.0
        %672 = vmatpush1.msra.mxu0 0.0
        %673 = vmatprep.subr.mxu0 0.0
        %674 = vmatpush1.msra.mxu0 0.0
        %675 = vmatprep.subr.mxu0 0.0
        %676 = vmatpush1.msra.mxu0 0.0
        %677 = vmatprep.subr.mxu0 0.0
        %678 = vmatpush1.msra.mxu0 0.0
        %679 = vmatprep.subr.mxu0 0.0
        %680 = vmatpush1.msra.mxu0 0.0
        %681 = vmatprep.subr.mxu0 0.0
        %682 = vmatpush1.msra.mxu0 0.0
        %683 = vmatprep.subr.mxu0 0.0
        %684 = vmatpush1.msra.mxu0 0.0
        %685 = vmatprep.subr.mxu0 0.0
        %686 = vmatpush1.msra.mxu0 0.0
        %687 = vmatprep.subr.mxu0 0.0
        %688 = vmatpush1.msra.mxu0 0.0
        %689 = vmatprep.subr.mxu0 0.0
        %690 = vmatpush1.msra.mxu0 0.0
        %691 = vmatprep.subr.mxu0 0.0
        %692 = vmatpush1.msra.mxu0 0.0
        %693 = vmatprep.subr.mxu0 0.0
        %694 = vmatpush1.msra.mxu0 0.0
        %695 = vmatprep.subr.mxu0 0.0
        %696 = vmatpush1.msra.mxu0 0.0
        %697 = vmatprep.subr.mxu0 0.0
        %698 = vmatpush1.msra.mxu0 0.0
        %699 = vmatprep.subr.mxu0 0.0
        %700 = vmatpush1.msra.mxu0 0.0
        %701 = vmatprep.subr.mxu0 0.0
        %702 = vmatpush1.msra.mxu0 0.0
        %703 = vmatprep.subr.mxu0 0.0
        %704 = vmatpush1.msra.mxu0 0.0
        %705 = vmatprep.subr.mxu0 0.0
        %706 = vmatpush1.msra.mxu0 0.0
        %707 = vmatprep.mubr.f32.mxu0 0.0
        %708 = vmatmul.mubr.f32.gmra.mrb[0].mxu0 %v638
        %v709 = vpop.f32.mrb[0].mxu0
        %v710 = vadd.f32 0.0, %v709
        %v711 = vpop.f32.mrb[0].mxu0
        %712 = vmatprep.mubr.f32.mxu0 0.0
        %713 = vmatmul.mubr.f32.gmra.mrb[0].mxu0 %v641
        %v714 = vpop.f32.mrb[0].mxu0
        %v715 = vadd.f32 0.0, %v714
        %v716 = vpop.f32.mrb[0].mxu0
        %717 = vdwg.mxu0
        %v718 = vmul.f32 %v710, 0.020408163
        %v719 = vmul.f32 %v715, 0.020408163
        %v720 = vmul.f32 %v224, %v224
        %v721 = vmul.f32 %v225, %v225
        %722 = vmatprep.subr.mxu0 0.0
        %723 = vmatpush1.msra.mxu0 %v720
        %724 = vmatprep.subr.mxu0 0.0
        %725 = vmatpush1.msra.mxu0 %v721
        %726 = vmatprep.subr.mxu0 0.0
        %727 = vmatpush1.msra.mxu0 0.0
        %728 = vmatprep.subr.mxu0 0.0
        %729 = vmatpush1.msra.mxu0 0.0
        %730 = vmatprep.subr.mxu0 0.0
        %731 = vmatpush1.msra.mxu0 0.0
        %732 = vmatprep.subr.mxu0 0.0
        %733 = vmatpush1.msra.mxu0 0.0
        %734 = vmatprep.subr.mxu0 0.0
        %735 = vmatpush1.msra.mxu0 0.0
        %736 = vmatprep.subr.mxu0 0.0
        %737 = vmatpush1.msra.mxu0 0.0
        %738 = vmatprep.subr.mxu0 0.0
        %739 = vmatpush1.msra.mxu0 0.0
        %740 = vmatprep.subr.mxu0 0.0
        %741 = vmatpush1.msra.mxu0 0.0
        %742 = vmatprep.subr.mxu0 0.0
        %743 = vmatpush1.msra.mxu0 0.0
        %744 = vmatprep.subr.mxu0 0.0
        %745 = vmatpush1.msra.mxu0 0.0
        %746 = vmatprep.subr.mxu0 0.0
        %747 = vmatpush1.msra.mxu0 0.0
        %748 = vmatprep.subr.mxu0 0.0
        %749 = vmatpush1.msra.mxu0 0.0
        %750 = vmatprep.subr.mxu0 0.0
        %751 = vmatpush1.msra.mxu0 0.0
        %752 = vmatprep.subr.mxu0 0.0
        %753 = vmatpush1.msra.mxu0 0.0
        %754 = vmatprep.subr.mxu0 0.0
        %755 = vmatpush1.msra.mxu0 0.0
        %756 = vmatprep.subr.mxu0 0.0
        %757 = vmatpush1.msra.mxu0 0.0
        %758 = vmatprep.subr.mxu0 0.0
        %759 = vmatpush1.msra.mxu0 0.0
        %760 = vmatprep.subr.mxu0 0.0
        %761 = vmatpush1.msra.mxu0 0.0
        %762 = vmatprep.subr.mxu0 0.0
        %763 = vmatpush1.msra.mxu0 0.0
        %764 = vmatprep.subr.mxu0 0.0
        %765 = vmatpush1.msra.mxu0 0.0
        %766 = vmatprep.subr.mxu0 0.0
        %767 = vmatpush1.msra.mxu0 0.0
        %768 = vmatprep.subr.mxu0 0.0
        %769 = vmatpush1.msra.mxu0 0.0
        %770 = vmatprep.subr.mxu0 0.0
        %771 = vmatpush1.msra.mxu0 0.0
        %772 = vmatprep.subr.mxu0 0.0
        %773 = vmatpush1.msra.mxu0 0.0
        %774 = vmatprep.subr.mxu0 0.0
        %775 = vmatpush1.msra.mxu0 0.0
        %776 = vmatprep.subr.mxu0 0.0
        %777 = vmatpush1.msra.mxu0 0.0
        %778 = vmatprep.subr.mxu0 0.0
        %779 = vmatpush1.msra.mxu0 0.0
        %780 = vmatprep.subr.mxu0 0.0
        %781 = vmatpush1.msra.mxu0 0.0
        %782 = vmatprep.subr.mxu0 0.0
        %783 = vmatpush1.msra.mxu0 0.0
        %784 = vmatprep.subr.mxu0 0.0
        %785 = vmatpush1.msra.mxu0 0.0
        %786 = vmatprep.mubr.f32.mxu0 0.0
        %787 = vmatmul.mubr.f32.gmra.mrb[0].mxu0 %v238
        %v788 = vpop.f32.mrb[0].mxu0
        %v789 = vadd.f32 0.0, %v788
        %v790 = vpop.f32.mrb[0].mxu0
        %791 = vmatprep.mubr.f32.mxu0 0.0
        %792 = vmatmul.mubr.f32.gmra.mrb[0].mxu0 %v241
        %v793 = vpop.f32.mrb[0].mxu0
        %v794 = vadd.f32 0.0, %v793
        %v795 = vpop.f32.mrb[0].mxu0
        %796 = vdwg.mxu0
        %v798 = vsel %vm318, %v789, 0
        %v801 = vsel %vm318, %v794, 0
        %803 = vmatprep.subr.mxu0 0.0
        %804 = vmatpush1.msra.mxu0 %v228
        %805 = vmatprep.subr.mxu0 0.0
        %806 = vmatpush1.msra.mxu0 %v229
        %807 = vmatprep.subr.mxu0 0.0
        %808 = vmatpush1.msra.mxu0 %v230
        %809 = vmatprep.subr.mxu0 0.0
        %810 = vmatpush1.msra.mxu0 %v231
        %811 = vmatprep.subr.mxu0 0.0
        %812 = vmatpush1.msra.mxu0 %v232
        %813 = vmatprep.subr.mxu0 0.0
        %814 = vmatpush1.msra.mxu0 %v233
        %815 = vmatprep.subr.mxu0 0.0
        %816 = vmatpush1.msra.mxu0 %v234
        %817 = vmatprep.subr.mxu0 0.0
        %818 = vmatpush1.msra.mxu0 %v235
        %819 = vmatprep.subr.mxu0 0.0
        %820 = vmatpush1.msra.mxu0 0.0
        %821 = vmatprep.subr.mxu0 0.0
        %822 = vmatpush1.msra.mxu0 0.0
        %823 = vmatprep.subr.mxu0 0.0
        %824 = vmatpush1.msra.mxu0 0.0
        %825 = vmatprep.subr.mxu0 0.0
        %826 = vmatpush1.msra.mxu0 0.0
        %827 = vmatprep.subr.mxu0 0.0
        %828 = vmatpush1.msra.mxu0 0.0
        %829 = vmatprep.subr.mxu0 0.0
        %830 = vmatpush1.msra.mxu0 0.0
        %831 = vmatprep.subr.mxu0 0.0
        %832 = vmatpush1.msra.mxu0 0.0
        %833 = vmatprep.subr.mxu0 0.0
        %834 = vmatpush1.msra.mxu0 0.0
        %835 = vmatprep.subr.mxu0 0.0
        %836 = vmatpush1.msra.mxu0 0.0
        %837 = vmatprep.subr.mxu0 0.0
        %838 = vmatpush1.msra.mxu0 0.0
        %839 = vmatprep.subr.mxu0 0.0
        %840 = vmatpush1.msra.mxu0 0.0
        %841 = vmatprep.subr.mxu0 0.0
        %842 = vmatpush1.msra.mxu0 0.0
        %843 = vmatprep.subr.mxu0 0.0
        %844 = vmatpush1.msra.mxu0 0.0
        %845 = vmatprep.subr.mxu0 0.0
        %846 = vmatpush1.msra.mxu0 0.0
        %847 = vmatprep.subr.mxu0 0.0
        %848 = vmatpush1.msra.mxu0 0.0
        %849 = vmatprep.subr.mxu0 0.0
        %850 = vmatpush1.msra.mxu0 0.0
        %851 = vmatprep.subr.mxu0 0.0
        %852 = vmatpush1.msra.mxu0 0.0
        %853 = vmatprep.subr.mxu0 0.0
        %854 = vmatpush1.msra.mxu0 0.0
        %855 = vmatprep.subr.mxu0 0.0
        %856 = vmatpush1.msra.mxu0 0.0
        %857 = vmatprep.subr.mxu0 0.0
        %858 = vmatpush1.msra.mxu0 0.0
        %859 = vmatprep.subr.mxu0 0.0
        %860 = vmatpush1.msra.mxu0 0.0
        %861 = vmatprep.subr.mxu0 0.0
        %862 = vmatpush1.msra.mxu0 0.0
        %863 = vmatprep.subr.mxu0 0.0
        %864 = vmatpush1.msra.mxu0 0.0
        %865 = vmatprep.subr.mxu0 0.0
        %866 = vmatpush1.msra.mxu0 0.0
        %867 = vmatprep.mubr.f32.mxu0 0.0
        %868 = vmatmul.mubr.f32.gmra.mrb[0].mxu0 %v798
        %v869 = vpop.f32.mrb[0].mxu0
        %v870 = vadd.f32 0.0, %v869
        %v871 = vpop.f32.mrb[0].mxu0
        %872 = vmatprep.mubr.f32.mxu0 0.0
        %873 = vmatmul.mubr.f32.gmra.mrb[0].mxu0 %v801
        %v874 = vpop.f32.mrb[0].mxu0
        %v875 = vadd.f32 0.0, %v874
        %v876 = vpop.f32.mrb[0].mxu0
        %877 = vdwg.mxu0
        %v878 = vmul.f32 %v870, 0.020408163
        %v879 = vmul.f32 %v875, 0.020408163
        %v880 = vmul.f32 %v222, %v224
        %v881 = vmul.f32 %v223, %v225
        %882 = vmatprep.subr.mxu0 0.0
        %883 = vmatpush1.msra.mxu0 %v880
        %884 = vmatprep.subr.mxu0 0.0
        %885 = vmatpush1.msra.mxu0 %v881
        %886 = vmatprep.subr.mxu0 0.0
        %887 = vmatpush1.msra.mxu0 0.0
        %888 = vmatprep.subr.mxu0 0.0
        %889 = vmatpush1.msra.mxu0 0.0
        %890 = vmatprep.subr.mxu0 0.0
        %891 = vmatpush1.msra.mxu0 0.0
        %892 = vmatprep.subr.mxu0 0.0
        %893 = vmatpush1.msra.mxu0 0.0
        %894 = vmatprep.subr.mxu0 0.0
        %895 = vmatpush1.msra.mxu0 0.0
        %896 = vmatprep.subr.mxu0 0.0
        %897 = vmatpush1.msra.mxu0 0.0
        %898 = vmatprep.subr.mxu0 0.0
        %899 = vmatpush1.msra.mxu0 0.0
        %900 = vmatprep.subr.mxu0 0.0
        %901 = vmatpush1.msra.mxu0 0.0
        %902 = vmatprep.subr.mxu0 0.0
        %903 = vmatpush1.msra.mxu0 0.0
        %904 = vmatprep.subr.mxu0 0.0
        %905 = vmatpush1.msra.mxu0 0.0
        %906 = vmatprep.subr.mxu0 0.0
        %907 = vmatpush1.msra.mxu0 0.0
        %908 = vmatprep.subr.mxu0 0.0
        %909 = vmatpush1.msra.mxu0 0.0
        %910 = vmatprep.subr.mxu0 0.0
        %911 = vmatpush1.msra.mxu0 0.0
        %912 = vmatprep.subr.mxu0 0.0
        %913 = vmatpush1.msra.mxu0 0.0
        %914 = vmatprep.subr.mxu0 0.0
        %915 = vmatpush1.msra.mxu0 0.0
        %916 = vmatprep.subr.mxu0 0.0
        %917 = vmatpush1.msra.mxu0 0.0
        %918 = vmatprep.subr.mxu0 0.0
        %919 = vmatpush1.msra.mxu0 0.0
        %920 = vmatprep.subr.mxu0 0.0
        %921 = vmatpush1.msra.mxu0 0.0
        %922 = vmatprep.subr.mxu0 0.0
        %923 = vmatpush1.msra.mxu0 0.0
        %924 = vmatprep.subr.mxu0 0.0
        %925 = vmatpush1.msra.mxu0 0.0
        %926 = vmatprep.subr.mxu0 0.0
        %927 = vmatpush1.msra.mxu0 0.0
        %928 = vmatprep.subr.mxu0 0.0
        %929 = vmatpush1.msra.mxu0 0.0
        %930 = vmatprep.subr.mxu0 0.0
        %931 = vmatpush1.msra.mxu0 0.0
        %932 = vmatprep.subr.mxu0 0.0
        %933 = vmatpush1.msra.mxu0 0.0
        %934 = vmatprep.subr.mxu0 0.0
        %935 = vmatpush1.msra.mxu0 0.0
        %936 = vmatprep.subr.mxu0 0.0
        %937 = vmatpush1.msra.mxu0 0.0
        %938 = vmatprep.subr.mxu0 0.0
        %939 = vmatpush1.msra.mxu0 0.0
        %940 = vmatprep.subr.mxu0 0.0
        %941 = vmatpush1.msra.mxu0 0.0
        %942 = vmatprep.subr.mxu0 0.0
        %943 = vmatpush1.msra.mxu0 0.0
        %944 = vmatprep.subr.mxu0 0.0
        %945 = vmatpush1.msra.mxu0 0.0
        %946 = vmatprep.mubr.f32.mxu0 0.0
        %947 = vmatmul.mubr.f32.gmra.mrb[0].mxu0 %v238
        %v948 = vpop.f32.mrb[0].mxu0
        %v949 = vadd.f32 0.0, %v948
        %v950 = vpop.f32.mrb[0].mxu0
        %951 = vmatprep.mubr.f32.mxu0 0.0
        %952 = vmatmul.mubr.f32.gmra.mrb[0].mxu0 %v241
        %v953 = vpop.f32.mrb[0].mxu0
        %v954 = vadd.f32 0.0, %v953
        %v955 = vpop.f32.mrb[0].mxu0
        %956 = vdwg.mxu0
        %v958 = vsel %vm318, %v949, 0
        %v961 = vsel %vm318, %v954, 0
        %963 = vmatprep.subr.mxu0 0.0
        %964 = vmatpush1.msra.mxu0 %v228
        %965 = vmatprep.subr.mxu0 0.0
        %966 = vmatpush1.msra.mxu0 %v229
        %967 = vmatprep.subr.mxu0 0.0
        %968 = vmatpush1.msra.mxu0 %v230
        %969 = vmatprep.subr.mxu0 0.0
        %970 = vmatpush1.msra.mxu0 %v231
        %971 = vmatprep.subr.mxu0 0.0
        %972 = vmatpush1.msra.mxu0 %v232
        %973 = vmatprep.subr.mxu0 0.0
        %974 = vmatpush1.msra.mxu0 %v233
        %975 = vmatprep.subr.mxu0 0.0
        %976 = vmatpush1.msra.mxu0 %v234
        %977 = vmatprep.subr.mxu0 0.0
        %978 = vmatpush1.msra.mxu0 %v235
        %979 = vmatprep.subr.mxu0 0.0
        %980 = vmatpush1.msra.mxu0 0.0
        %981 = vmatprep.subr.mxu0 0.0
        %982 = vmatpush1.msra.mxu0 0.0
        %983 = vmatprep.subr.mxu0 0.0
        %984 = vmatpush1.msra.mxu0 0.0
        %985 = vmatprep.subr.mxu0 0.0
        %986 = vmatpush1.msra.mxu0 0.0
        %987 = vmatprep.subr.mxu0 0.0
        %988 = vmatpush1.msra.mxu0 0.0
        %989 = vmatprep.subr.mxu0 0.0
        %990 = vmatpush1.msra.mxu0 0.0
        %991 = vmatprep.subr.mxu0 0.0
        %992 = vmatpush1.msra.mxu0 0.0
        %993 = vmatprep.subr.mxu0 0.0
        %994 = vmatpush1.msra.mxu0 0.0
        %995 = vmatprep.subr.mxu0 0.0
        %996 = vmatpush1.msra.mxu0 0.0
        %997 = vmatprep.subr.mxu0 0.0
        %998 = vmatpush1.msra.mxu0 0.0
        %999 = vmatprep.subr.mxu0 0.0
        %1000 = vmatpush1.msra.mxu0 0.0
        %1001 = vmatprep.subr.mxu0 0.0
        %1002 = vmatpush1.msra.mxu0 0.0
        %1003 = vmatprep.subr.mxu0 0.0
        %1004 = vmatpush1.msra.mxu0 0.0
        %1005 = vmatprep.subr.mxu0 0.0
        %1006 = vmatpush1.msra.mxu0 0.0
        %1007 = vmatprep.subr.mxu0 0.0
        %1008 = vmatpush1.msra.mxu0 0.0
        %1009 = vmatprep.subr.mxu0 0.0
        %1010 = vmatpush1.msra.mxu0 0.0
        %1011 = vmatprep.subr.mxu0 0.0
        %1012 = vmatpush1.msra.mxu0 0.0
        %1013 = vmatprep.subr.mxu0 0.0
        %1014 = vmatpush1.msra.mxu0 0.0
        %1015 = vmatprep.subr.mxu0 0.0
        %1016 = vmatpush1.msra.mxu0 0.0
        %1017 = vmatprep.subr.mxu0 0.0
        %1018 = vmatpush1.msra.mxu0 0.0
        %1019 = vmatprep.subr.mxu0 0.0
        %1020 = vmatpush1.msra.mxu0 0.0
        %1021 = vmatprep.subr.mxu0 0.0
        %1022 = vmatpush1.msra.mxu0 0.0
        %1023 = vmatprep.subr.mxu0 0.0
        %1024 = vmatpush1.msra.mxu0 0.0
        %1025 = vmatprep.subr.mxu0 0.0
        %1026 = vmatpush1.msra.mxu0 0.0
        %1027 = vmatprep.mubr.f32.mxu0 0.0
        %1028 = vmatmul.mubr.f32.gmra.mrb[0].mxu0 %v958
        %v1029 = vpop.f32.mrb[0].mxu0
        %v1030 = vadd.f32 0.0, %v1029
        %v1031 = vpop.f32.mrb[0].mxu0
        %1032 = vmatprep.mubr.f32.mxu0 0.0
        %1033 = vmatmul.mubr.f32.gmra.mrb[0].mxu0 %v961
        %v1034 = vpop.f32.mrb[0].mxu0
        %v1035 = vadd.f32 0.0, %v1034
        %v1036 = vpop.f32.mrb[0].mxu0
        %1037 = vdwg.mxu0
        %v1038 = vmul.f32 %v1030, 0.020408163
        %v1039 = vmul.f32 %v1035, 0.020408163
        %s1040 = sld [smem:[#allocation3 + %s25]]
        %s1041 = smul.f32 %s1040, 0.01
        %s1042 = smul.f32 %s1041, %s1041
        %s1043 = smul.f32 %s1040, 0.03
        %s1044 = smul.f32 %s1043, %s1043
        %v1045 = vmul.f32 %v400, %v400
        %v1046 = vmul.f32 %v401, %v401
        %v1047 = vsub.f32 %v718, %v1045
        %v1048 = vsub.f32 %v719, %v1046
        %v1049 = vmul.f32 %v1047, 1.0208334
        %v1050 = vmul.f32 %v1048, 1.0208334
        %v1051 = vmul.f32 %v558, %v558
        %v1052 = vmul.f32 %v559, %v559
        %v1053 = vsub.f32 %v878, %v1051
        %v1054 = vsub.f32 %v879, %v1052
        %v1055 = vmul.f32 %v1053, 1.0208334
        %v1056 = vmul.f32 %v1054, 1.0208334
        %v1057 = vmul.f32 %v400, %v558
        %v1058 = vmul.f32 %v401, %v559
        %v1059 = vsub.f32 %v1038, %v1057
        %v1060 = vsub.f32 %v1039, %v1058
        %v1061 = vmul.f32 %v1059, 1.0208334
        %v1062 = vmul.f32 %v1060, 1.0208334
        %v1063 = vmul.f32 %v400, 2.0
        %v1064 = vmul.f32 %v401, 2.0
        %v1065 = vmul.f32 %v1063, %v558
        %v1066 = vmul.f32 %v1064, %v559
        %v1067 = vstv %s1042
        %v1068 = vadd.f32 %v1065, %v1067
        %v1069 = vadd.f32 %v1066, %v1067
        %v1070 = vmul.f32 %v1061, 2.0
        %v1071 = vmul.f32 %v1062, 2.0
        %v1072 = vstv %s1044
        %v1073 = vadd.f32 %v1070, %v1072
        %v1074 = vadd.f32 %v1071, %v1072
        %v1075 = vadd.f32 %v1045, %v1051
        %v1076 = vadd.f32 %v1046, %v1052
        %v1077 = vadd.f32 %v1075, %v1067
        %v1078 = vadd.f32 %v1076, %v1067
        %v1079 = vadd.f32 %v1049, %v1055
        %v1080 = vadd.f32 %v1050, %v1056
        %v1081 = vadd.f32 %v1079, %v1072
        %v1082 = vadd.f32 %v1080, %v1072
        %v1083 = vmul.f32 %v1077, %v1081
        %v1084 = vmul.f32 %v1078, %v1082
        %v1085 = vrcp.pop %v1083
        %v1086 = vrcp.pop %v1084
        %v1087 = vmul.f32 %v1083, %v1085
        %v1088 = vmul.f32 %v1084, %v1086
        %v1089 = vsub.f32 2.0, %v1087
        %v1090 = vsub.f32 2.0, %v1088
        %v1091 = vmul.f32 %v1085, %v1089
        %v1092 = vmul.f32 %v1086, %v1090
        %v1093 = vmul.f32 %v1068, %v1073
        %v1094 = vmul.f32 %v1069, %v1074
        %v1095 = vmul.f32 %v1093, %v1091
        %v1096 = vmul.f32 %v1094, %v1092
        %vm1097 = vcmask 326656
        %v1098 = vsel %vm1097, %v1095, 0.0
        %vm1099 = vcmask 320512
        %v1100 = vsel %vm1099, %v1096, 0.0
        %v1101 = vadd.f32 %v1098, %v1100
        %v1102 = vrot.slane %v1101, 4
        %v1103 = vadd.f32 %v1101, %v1102
        %v1104 = vrot.slane %v1103, 2
        %v1105 = vadd.f32 %v1103, %v1104
        %v1106 = vrot.slane %v1105, 1
        %v1107 = vadd.f32 %v1105, %v1106
        %vm1108 = vcmask 319488
        %1109 = vst.msk [vmem:[%s211] sm:$0x1] %vm1108, %v1107
        %s1110 = sand.u32 %s127, 1
        %s1111 = scalar_lea.sflag [#allocation5], %s1110
        %s1112 = sand.u32 %s127, 1
        %s1113 = scalar_lea.vmem [#allocation4], %s1112
        // Predicated region
        $region37: #{tpu_custom_call.1} parent=35 // pred_check
          %p1114 = pneg %p137
        $region38: #{tpu_custom_call.1} parent=35 // pred_check_branch
          %1116 = sbr.rel (%p1114) target = $region40
        $region39: #{tpu_custom_call.1} parent=35 // pred_region
          %s1118 = ssub.s32 16, 16
          %1119 = vsyncadd %s1111, %s1118
          %s1120 = smul.addr %s25, 16
          %s1121 = scalar_lea.hbm %s5, %s1120
          %s1123 = sshll.u32 %s1113, 4
          %s1124 = int_to_ptr.vmem [resolvable:$true] %s1123
          %1126 = dma.vmem_to_hbm [thread:$0]  %s1124, 16, %s1121, %s1111
        $region40: #{tpu_custom_call.1} parent=35 // pred_fallthru
          _
      $region36: #{tpu_custom_call.1} parent=5 // pred_fallthru
        _
      %p1127 = scmp.le.s32.totalorder 2, %s20
      // Predicated region
      $region41: #{tpu_custom_call.1} parent=5 // pred_check
        %p1128 = pneg %p1127
      $region42: #{tpu_custom_call.1} parent=5 // pred_check_branch
        %1130 = sbr.rel (%p1128) target = $region44
      $region43: #{tpu_custom_call.1} parent=5 // pred_region
        %s1131 = ssub.s32 %s20, 2
        // Predicated region
        $region45: #{tpu_custom_call.1} parent=43 // pred_check
          %p1132 = pneg %p143
        $region46: #{tpu_custom_call.1} parent=43 // pred_check_branch
          %1134 = sbr.rel (%p1132) target = $region48
        $region47: #{tpu_custom_call.1} parent=43 // pred_region
          %s1135 = sand.u32 %s128, 1
          %s1136 = scalar_lea.sflag [#allocation5], %s1135
          %s1137 = sand.u32 %s128, 1
          %s1138 = scalar_lea.vmem [#allocation4], %s1137
          %1139 = dma.done %s1136, 16
        $region48: #{tpu_custom_call.1} parent=43 // pred_fallthru
          _
      $region44: #{tpu_custom_call.1} parent=5 // pred_fallthru
        _
    $region6: #{tpu_custom_call.1} parent=1 // loop_footer
      %s24 = sadd.s32 1, %s20
    $region7: #{tpu_custom_call.1} parent=1 // loop_footer_branch
      %19 = sbr.rel target = $region3
    $region8: #{tpu_custom_call.1} parent=1 // loop_exit
      _
    %1140 = vsyncpa [#allocation5], 1
    %s1141 = scalar_lea.sflag [#allocation5], 1
    %1142 = vsyncpa %s1141, 1

</llo_original>
